<compile_context>
chip_gen: v6e
topology: v6e:2x2x1
jax: 0.10.0
libtpu: 0.0.40
codegen_flags: <defaults>
</compile_context>

<pallas_src>
import functools

import jax
import jax.numpy as jnp
from jax.experimental import pallas as pl
from jax.experimental.pallas import tpu as pltpu


def _iou_counts_kernel(preds_ref, gts_ref, out_ref, acc_ref, cls_ref, *,
                       hw, n_half, mask_last):
    i = pl.program_id(2)                      # pixel-tile index within this split

    @pl.when(i == 0)
    def _():
        acc_ref[...] = jnp.zeros_like(acc_ref)
        cls_ref[...] = jax.lax.broadcasted_iota(jnp.int32, cls_ref.shape, 0)

    p = preds_ref[...]                        # (C, T) logits, input dtype
    g = gts_ref[...]                          # (1, T) int32 labels
    C, T = p.shape
    classes = cls_ref[...]                    # (C, T) class id per sublane (hoisted)

    # argmax over channels (sublane axis), first-max-wins:
    #   m = max over channels; best_idx = min class index attaining the max.
    m = jnp.max(p, axis=0, keepdims=True)                                 # (1, T)
    best_idx = jnp.min(jnp.where(p == m, classes, C), axis=0, keepdims=True)

    if mask_last:
        # Fold validity into the (1, T) rows only (sentinel class id C never
        # matches a real class), so no (C, T)-wide masking is needed.
        t_global = pl.program_id(1) * n_half + i
        lane = jax.lax.broadcasted_iota(jnp.int32, (1, T), 1)
        valid = (t_global * T + lane) < hw                                # (1, T)
        g = jnp.where(valid, g, C)
        best_idx = jnp.where(valid, best_idx, C)

    pred_i = (best_idx == classes).astype(jnp.int32)                      # (C, T)
    gt_i = (g == classes).astype(jnp.int32)                               # (C, T)

    # Packed per-lane accumulator: low 16 bits = pred_count + gt_count,
    # high 16 bits = intersection count.  Needs 2 * n_half <= 65535.
    acc_ref[...] += pred_i + gt_i + ((pred_i & gt_i) << 16)

    @pl.when(i == pl.num_programs(2) - 1)
    def _():
        acc = acc_ref[...]
        inter = jnp.sum(acc >> 16, axis=1, keepdims=True)                 # (C, 1)
        pg = jnp.sum(acc & 0xFFFF, axis=1, keepdims=True)                 # (C, 1)
        out_ref[...] = jnp.concatenate([inter, pg - inter], axis=1)       # inter|union


def _pick_tile(hw, c, pred_itemsize, vmem_budget_bytes):
    """Pick a lane tile: large, VMEM-budgeted, multiple of 128 (or == HW)."""
    # per-lane VMEM bytes: double-buffered preds (C*itemsize) + gts (4B),
    # one packed (C, tile) int32 accumulator + one (C, tile) int32 class iota.
    per_lane = 2 * (c * pred_itemsize + 4) + 8 * c
    max_tile = max(128, (vmem_budget_bytes // per_lane) // 128 * 128)
    cap = min(32768, max_tile)
    if hw <= cap:
        return hw                             # single tile (block == full dim)
    # Prefer a multiple-of-128 divisor of HW so no partial tile / mask exists.
    if hw % 128 == 0:
        t = cap
        while t >= max(128, cap // 2):
            if hw % t == 0:
                return t
            t -= 128
    return cap


def iou_pallas(preds, gts, *, tile=None):
    """preds: (N, C, H, W) float logits; gts: (N, H, W) int labels -> scalar mIoU."""
    N, C, H, W = preds.shape
    HW = H * W

    preds3 = preds.reshape(N, C, HW)                 # view only, no transpose/copy
    gts3 = gts.reshape(N, 1, HW).astype(jnp.int32)

    # Per-generation VMEM sizing: 128 MiB chips (v5e/v6e) get ~42 MiB of tile
    # budget, v7x (64 MiB per TC) stays at ~21 MiB.
    try:
        vmem_cap = int(pltpu.get_tpu_info().vmem_capacity_bytes)
    except Exception:
        vmem_cap = 64 * 1024 * 1024            # conservative (v7x-safe) default
    budget = max(16 << 20, min(48 << 20, vmem_cap // 3))
    vmem_limit = int(min(vmem_cap * 3 // 4, 100 << 20))

    if tile is None:
        tile = _pick_tile(HW, C, preds3.dtype.itemsize, budget)
    n_tiles = pl.cdiv(HW, tile)

    # 2-way pixel-axis parallel split so v7x's second TensorCore has work even
    # when N is small; a sequential no-op on single-TC chips.
    split = 2 if (n_tiles % 2 == 0 and n_tiles >= 2) else 1
    n_half = n_tiles // split
    # Packed 16/16-bit accumulator headroom (per-lane counts <= 2 * n_half).
    assert n_half <= 32767, "too many pixel tiles for the packed accumulator"

    mask_last = (HW % tile) != 0
    kernel = functools.partial(_iou_counts_kernel, hw=HW, n_half=n_half,
                               mask_last=mask_last)

    counts = pl.pallas_call(
        kernel,
        out_shape=jax.ShapeDtypeStruct((N, split, C, 2), jnp.int32),
        grid_spec=pltpu.PrefetchScalarGridSpec(
            num_scalar_prefetch=0,
            grid=(N, split, n_half),
            in_specs=[
                pl.BlockSpec((pl.Squeezed(), C, tile),
                             lambda n, h, i: (n, 0, h * n_half + i)),
                pl.BlockSpec((pl.Squeezed(), 1, tile),
                             lambda n, h, i: (n, 0, h * n_half + i)),
            ],
            out_specs=pl.BlockSpec((pl.Squeezed(), pl.Squeezed(), C, 2),
                                   lambda n, h, i: (n, h, 0, 0)),
            scratch_shapes=[
                pltpu.VMEM((C, tile), jnp.int32),    # packed inter/pg partial counts
                pltpu.VMEM((C, tile), jnp.int32),    # hoisted class-id iota
            ],
        ),
        compiler_params=pltpu.CompilerParams(
            dimension_semantics=("parallel", "parallel", "arbitrary"),
            vmem_limit_bytes=vmem_limit,
        ),
    )(preds3, gts3)

    # Tiny finalize on (N, split, C, 2) exact int counts, then nanmean IoU.
    # (float32 division is exact only up to 2^24 counts per class — harmless
    #  ~1e-7 relative error for a metric at very large N*H*W.)
    inter = jnp.sum(counts[..., 0], axis=(0, 1)).astype(jnp.float32)      # (C,)
    union = jnp.sum(counts[..., 1], axis=(0, 1)).astype(jnp.float32)      # (C,)
    iou = jnp.where(union > 0, inter / jnp.where(union > 0, union, 1.0), jnp.nan)
    return jnp.nanmean(iou)


def _iou_reference(preds, gts):
    """Pure-JAX reference of the same metric for a sanity check."""
    C = preds.shape[1]
    pred_label = jnp.argmax(preds, axis=1)                                # (N, H, W)
    inter = jnp.array([jnp.sum((pred_label == c) & (gts == c)) for c in range(C)],
                      jnp.float32)
    union = jnp.array([jnp.sum((pred_label == c) | (gts == c)) for c in range(C)],
                      jnp.float32)
    iou = jnp.where(union > 0, inter / jnp.where(union > 0, union, 1.0), jnp.nan)
    return jnp.nanmean(iou)


if __name__ == "__main__":
    key = jax.random.PRNGKey(0)
    k1, k2 = jax.random.split(key)

    N, C, H, W = 2, 4, 16, 16          # n_categories = 4
    preds = jax.random.normal(k1, (N, C, H, W), dtype=jnp.float32)
    gts = jax.random.randint(k2, (N, H, W), 0, C, dtype=jnp.int32)

    miou = iou_pallas(preds, gts)
    miou = jax.block_until_ready(miou)

    ref = _iou_reference(preds, gts)
    assert jnp.allclose(miou, ref, atol=1e-6), (miou, ref)

    print("KERNEL_OK")
</pallas_src>

<mosaic_0001>
module attributes {stable_mosaic.version = 11 : i64} {
  func.func @_iou_counts_kernel(%arg0: i32, %arg1: i32, %arg2: i32, %arg3: memref<1x4x256xf32, #tpu.memory_space<vmem>>, %arg4: memref<1x1x256xi32, #tpu.memory_space<vmem>>, %arg5: memref<1x1x4x2xi32, #tpu.memory_space<vmem>>, %arg6: memref<4x256xi32, #tpu.memory_space<vmem>>, %arg7: memref<4x256xi32, #tpu.memory_space<vmem>>) attributes {dimension_semantics = [#tpu.dimension_semantics<parallel>, #tpu.dimension_semantics<parallel>, #tpu.dimension_semantics<arbitrary>], iteration_bounds = array<i64: 2, 1, 1>, scalar_prefetch = 0 : i64, scratch_operands = 2 : i64, tpu.core_type = #tpu.core_type<tc>, window_params = [{transform_indices = @transform_0, window_bounds = array<i64: 1, 4, 256>}, {transform_indices = @transform_1, window_bounds = array<i64: 1, 1, 256>}, {transform_indices = @transform_2, window_bounds = array<i64: 1, 1, 4, 2>}]} {
    %c0_i32 = arith.constant 0 : i32
    %0 = arith.cmpi eq, %arg2, %c0_i32 : i32
    %1 = arith.extui %0 : i1 to i32
    %c0_i32_0 = arith.constant 0 : i32
    %2 = arith.cmpi ne, %1, %c0_i32_0 : i32
    scf.if %2 {
      %c0_i32_15 = arith.constant 0 : i32
      %33 = vector.broadcast %c0_i32_15 : i32 to vector<4x256xi32>
      %c0_16 = arith.constant 0 : index
      %c0_17 = arith.constant 0 : index
      %34 = vector.load %arg6[%c0_16, %c0_17] : memref<4x256xi32, #tpu.memory_space<vmem>>, vector<4x256xi32>
      tpu.vector_store %arg6[%c0_16, %c0_17], %33 {strides = array<i32>} : memref<4x256xi32, #tpu.memory_space<vmem>>, vector<4x256xi32>,
      %35 = tpu.iota {dimensions = array<i32: 0>} : vector<4x256xi32>
      %c0_18 = arith.constant 0 : index
      %c0_19 = arith.constant 0 : index
      %36 = vector.load %arg7[%c0_18, %c0_19] : memref<4x256xi32, #tpu.memory_space<vmem>>, vector<4x256xi32>
      tpu.vector_store %arg7[%c0_18, %c0_19], %35 {strides = array<i32>} : memref<4x256xi32, #tpu.memory_space<vmem>>, vector<4x256xi32>,
    } else {
    }
    %c0 = arith.constant 0 : index
    %c0_1 = arith.constant 0 : index
    %c0_2 = arith.constant 0 : index
    %3 = vector.load %arg3[%c0, %c0_1, %c0_2] : memref<1x4x256xf32, #tpu.memory_space<vmem>>, vector<1x4x256xf32>
    %4 = vector.shape_cast %3 : vector<1x4x256xf32> to vector<4x256xf32>
    %c0_3 = arith.constant 0 : index
    %c0_4 = arith.constant 0 : index
    %c0_5 = arith.constant 0 : index
    %5 = vector.load %arg4[%c0_3, %c0_4, %c0_5] : memref<1x1x256xi32, #tpu.memory_space<vmem>>, vector<1x1x256xi32>
    %6 = vector.shape_cast %5 : vector<1x1x256xi32> to vector<1x256xi32>
    %c0_6 = arith.constant 0 : index
    %c0_7 = arith.constant 0 : index
    %7 = vector.load %arg7[%c0_6, %c0_7] : memref<4x256xi32, #tpu.memory_space<vmem>>, vector<4x256xi32>
    %cst = arith.constant dense<0xFF800000> : vector<256xf32>
    %8 = vector.multi_reduction <maximumf>, %4, %cst [0] : vector<4x256xf32> to vector<256xf32>
    %9 = vector.shape_cast %8 : vector<256xf32> to vector<1x256xf32>
    %10 = vector.broadcast %9 : vector<1x256xf32> to vector<4x256xf32>
    %11 = arith.cmpf oeq, %4, %10 : vector<4x256xf32>
    %c4_i32 = arith.constant 4 : i32
    %12 = vector.broadcast %c4_i32 : i32 to vector<4x256xi32>
    %13 = arith.select %11, %7, %12 : vector<4x256xi1>, vector<4x256xi32>
    %cst_8 = arith.constant dense<2147483647> : vector<256xi32>
    %14 = vector.multi_reduction <minsi>, %13, %cst_8 [0] : vector<4x256xi32> to vector<256xi32>
    %15 = vector.shape_cast %14 : vector<256xi32> to vector<1x256xi32>
    %16 = vector.broadcast %15 : vector<1x256xi32> to vector<4x256xi32>
    %17 = arith.cmpi eq, %16, %7 : vector<4x256xi32>
    %18 = arith.extui %17 : vector<4x256xi1> to vector<4x256xi32>
    %19 = vector.broadcast %6 : vector<1x256xi32> to vector<4x256xi32>
    %20 = arith.cmpi eq, %19, %7 : vector<4x256xi32>
    %21 = arith.extui %20 : vector<4x256xi1> to vector<4x256xi32>
    %c0_9 = arith.constant 0 : index
    %c0_10 = arith.constant 0 : index
    %22 = vector.load %arg6[%c0_9, %c0_10] : memref<4x256xi32, #tpu.memory_space<vmem>>, vector<4x256xi32>
    %23 = arith.addi %18, %21 : vector<4x256xi32>
    %24 = arith.andi %18, %21 : vector<4x256xi32>
    %c16_i32 = arith.constant 16 : i32
    %25 = vector.broadcast %c16_i32 : i32 to vector<4x256xi32>
    %26 = arith.shli %24, %25 : vector<4x256xi32>
    %27 = arith.addi %23, %26 : vector<4x256xi32>
    %28 = arith.addi %22, %27 : vector<4x256xi32>
    %c0_11 = arith.constant 0 : index
    %c0_12 = arith.constant 0 : index
    %29 = vector.load %arg6[%c0_11, %c0_12] : memref<4x256xi32, #tpu.memory_space<vmem>>, vector<4x256xi32>
    tpu.vector_store %arg6[%c0_11, %c0_12], %28 {strides = array<i32>} : memref<4x256xi32, #tpu.memory_space<vmem>>, vector<4x256xi32>,
    %c0_i32_13 = arith.constant 0 : i32
    %30 = arith.cmpi eq, %arg2, %c0_i32_13 : i32
    %31 = arith.extui %30 : i1 to i32
    %c0_i32_14 = arith.constant 0 : i32
    %32 = arith.cmpi ne, %31, %c0_i32_14 : i32
    scf.if %32 {
      %c0_15 = arith.constant 0 : index
      %c0_16 = arith.constant 0 : index
      %33 = vector.load %arg6[%c0_15, %c0_16] : memref<4x256xi32, #tpu.memory_space<vmem>>, vector<4x256xi32>
      %c16_i32_17 = arith.constant 16 : i32
      %34 = vector.broadcast %c16_i32_17 : i32 to vector<4x256xi32>
      %35 = arith.shrsi %33, %34 : vector<4x256xi32>
      %cst_18 = arith.constant dense<0> : vector<4xi32>
      %36 = vector.multi_reduction <add>, %35, %cst_18 [1] : vector<4x256xi32> to vector<4xi32>
      %37 = vector.shape_cast %36 : vector<4xi32> to vector<4x1xi32>
      %c65535_i32 = arith.constant 65535 : i32
      %38 = vector.broadcast %c65535_i32 : i32 to vector<4x256xi32>
      %39 = arith.andi %33, %38 : vector<4x256xi32>
      %cst_19 = arith.constant dense<0> : vector<4xi32>
      %40 = vector.multi_reduction <add>, %39, %cst_19 [1] : vector<4x256xi32> to vector<4xi32>
      %41 = vector.shape_cast %40 : vector<4xi32> to vector<4x1xi32>
      %42 = arith.subi %41, %37 : vector<4x1xi32>
      %43 = tpu.concatenate %37, %42 in 1 : vector<4x1xi32>, vector<4x1xi32> -> vector<4x2xi32>
      %c0_20 = arith.constant 0 : index
      %c0_21 = arith.constant 0 : index
      %c0_22 = arith.constant 0 : index
      %c0_23 = arith.constant 0 : index
      %44 = vector.load %arg5[%c0_20, %c0_21, %c0_22, %c0_23] : memref<1x1x4x2xi32, #tpu.memory_space<vmem>>, vector<1x1x4x2xi32>
      %45 = vector.shape_cast %44 : vector<1x1x4x2xi32> to vector<4x2xi32>
      %46 = vector.shape_cast %43 : vector<4x2xi32> to vector<1x1x4x2xi32>
      tpu.vector_store %arg5[%c0_20, %c0_21, %c0_22, %c0_23], %46 {strides = array<i32>} : memref<1x1x4x2xi32, #tpu.memory_space<vmem>>, vector<1x1x4x2xi32>,
    } else {
    }
    return
  }
  func.func @transform_0(%arg0: i32, %arg1: i32, %arg2: i32) -> (i32, i32, i32) {
    %c1_i32 = arith.constant 1 : i32
    %0 = arith.muli %arg1, %c1_i32 : i32
    %1 = arith.addi %0, %arg2 : i32
    %c0_i32 = arith.constant 0 : i32
    %c0_i32_0 = arith.constant 0 : i32
    return %arg0, %c0_i32, %1 : i32, i32, i32
  }
  func.func @transform_1(%arg0: i32, %arg1: i32, %arg2: i32) -> (i32, i32, i32) {
    %c1_i32 = arith.constant 1 : i32
    %0 = arith.muli %arg1, %c1_i32 : i32
    %1 = arith.addi %0, %arg2 : i32
    %c0_i32 = arith.constant 0 : i32
    %c0_i32_0 = arith.constant 0 : i32
    return %arg0, %c0_i32, %1 : i32, i32, i32
  }
  func.func @transform_2(%arg0: i32, %arg1: i32, %arg2: i32) -> (i32, i32, i32, i32) {
    %c0_i32 = arith.constant 0 : i32
    %c0_i32_0 = arith.constant 0 : i32
    %c0_i32_1 = arith.constant 0 : i32
    return %arg0, %arg1, %c0_i32, %c0_i32_0 : i32, i32, i32, i32
  }
}

</mosaic_0001>

<llo_original>
// kernel: tpu_custom_call.1
$region0: #{tpu_custom_call.1}
  #allocation0 [shape = 'u32[]', space=smem, size = 0x4, offset = 0x4, fixed_abs, tag = 'smem constant byte address 0x4 - core index']
  #allocation1 [shape = 'u32[144,128]{1,0:T(1,128)}', space=vmem, size = 0x12000, scoped, tag = 'internal scratch']
  #allocation2 [shape = 's32[4,256]{1,0:T(4,128)}', space=vmem, size = 0x1000, scoped, tag = 'scratch operand']
  #allocation3 [shape = 's32[4,256]{1,0:T(4,128)}', space=vmem, size = 0x1000, scoped, tag = 'scratch operand']
  %s0 = inlined_call_operand.hbm [shape: f32[2,4,256], index: 0, kind: input, shape index: {}]
  %s1 = inlined_call_operand.hbm [shape: s32[2,1,256], index: 1, kind: input, shape index: {}]
  %s2 = inlined_call_operand.vmem [shape: s32[2,1,4,2], index: 2, kind: output, shape index: {}]
  %s3 = sld [smem:[#allocation0]]
  $region57: #{tpu_custom_call.1} parent=0
    _
  %s5 = ssub.s32 1, %s3
  %s6 = scalar_select 0, %s5, %s3
  $region1: #{tpu_custom_call.1} parent=0
    #allocation4 [shape = 'u8[8192]{0}', space=vmem, size = 0x2000, scoped, tag = 'input window, operand 0']
    #allocation5 [shape = 's32[2]{0}', space=sflag, size = 0x8, scoped, tag = 'scoped memory for tpu_custom_call.1']
    #allocation6 [shape = 'u8[2048]{0}', space=vmem, size = 0x800, scoped, tag = 'input window, operand 1']
    #allocation7 [shape = 's32[2]{0}', space=sflag, size = 0x8, scoped, tag = 'scoped memory for tpu_custom_call.1']
    %7 = vsyncpa [#allocation5], 0
    %s8 = scalar_lea.sflag [#allocation5], 1
    %9 = vsyncpa %s8, 0
    %10 = vsyncpa [#allocation7], 0
    %s11 = scalar_lea.sflag [#allocation7], 1
    %12 = vsyncpa %s11, 0
    loop: start=0, step=1, limit=4
    $region2: #{tpu_custom_call.1} parent=1 // loop_pre_header
      _
    $region3: #{tpu_custom_call.1} parent=1 // loop_header
      %s14 = sphi 0, %s18
      %p15 = scmp.ge.s32.totalorder %s14, 4
      %s21 = sphi 0, %s40
      %s22 = sphi 0, %s36
      %s23 = sphi 0, %s32
      %s24 = sphi 0, %s21
      %s25 = sphi 0, %s22
      %s26 = sphi 0, %s23
      %s27 = sphi 0, %s24
      %s28 = sphi 0, %s25
      %s29 = sphi 0, %s26
      %s47 = sphi 0, %s49
      %s50 = sphi 0, %s47
      %s51 = sphi 0, %s50
      %s67 = sphi 0, %s51
      %s77 = sphi 0, %s79
      %s80 = sphi 0, %s77
      %s81 = sphi 0, %s80
      %s97 = sphi 0, %s81
      %s105 = sphi 0, %s107
      %s108 = sphi 0, %s105
      %s109 = sphi 0, %s108
      %s125 = sphi 0, %s109
    $region4: #{tpu_custom_call.1} parent=1 // loop_header_branch
      %17 = sbr.rel (%p15) target = $region8
    $region5: #{tpu_custom_call.1} parent=1 // loop_body
      %s19 = ssub.s32 %s14, 1
      %s20 = ssub.s32 %s14, 2
      %s30 = sadd.s32 1, %s23
      %p31 = scmp.ge.s32.totalorder %s30, 1
      %s32 = scalar_select %p31, 0, %s30
      %s33 = sadd.s32 1, %s22
      %s34 = scalar_select %p31, %s33, %s22
      %p35 = scmp.ge.s32.totalorder %s34, 1
      %s36 = scalar_select %p35, 0, %s34
      %s37 = sadd.s32 1, %s21
      %s38 = scalar_select %p35, %s37, %s21
      %p39 = scmp.ge.s32.totalorder %s38, 2
      %s40 = scalar_select %p39, 0, %s38
      %s41 = sadd.s32 %s22, %s23
      %s42 = sadd.s32 %s36, %s32
      %s43 = ssub.s32 %s21, %s40
      %s44 = ssub.s32 %s41, %s42
      %s45 = sor.u32 %s43, %s44
      %p46 = scmp.eq.s32.totalorder %s45, 0
      %s48 = sadd.s32 %s47, 1
      %s49 = scalar_select %p46, %s47, %s48
      %p52 = pneg %p46
      %p53 = scmp.eq.s32.totalorder %s14, 1
      %p54 = por %p52, %p53
      %p55 = scmp.ne.s32.totalorder %s47, %s50
      %p56 = scmp.eq.s32.totalorder %s14, 0
      %p57 = por %p55, %p56
      %p58 = scmp.ne.s32.totalorder %s47, %s50
      %p59 = scmp.eq.s32.totalorder %s19, 1
      %p60 = por %p58, %p59
      %p61 = scmp.ne.s32.totalorder %s50, %s51
      %p62 = scmp.eq.s32.totalorder %s19, 0
      %p63 = por %p61, %p62
      %p64 = scmp.ne.s32.totalorder %s50, %s51
      %p65 = scmp.eq.s32.totalorder %s20, 1
      %p66 = por %p64, %p65
      %p68 = scmp.ne.s32.totalorder %s51, %s67
      %p69 = scmp.eq.s32.totalorder %s20, 0
      %p70 = por %p68, %p69
      %s71 = sadd.s32 %s22, %s23
      %s72 = sadd.s32 %s36, %s32
      %s73 = ssub.s32 %s21, %s40
      %s74 = ssub.s32 %s71, %s72
      %s75 = sor.u32 %s73, %s74
      %p76 = scmp.eq.s32.totalorder %s75, 0
      %s78 = sadd.s32 %s77, 1
      %s79 = scalar_select %p76, %s77, %s78
      %p82 = pneg %p76
      %p83 = scmp.eq.s32.totalorder %s14, 1
      %p84 = por %p82, %p83
      %p85 = scmp.ne.s32.totalorder %s77, %s80
      %p86 = scmp.eq.s32.totalorder %s14, 0
      %p87 = por %p85, %p86
      %p88 = scmp.ne.s32.totalorder %s77, %s80
      %p89 = scmp.eq.s32.totalorder %s19, 1
      %p90 = por %p88, %p89
      %p91 = scmp.ne.s32.totalorder %s80, %s81
      %p92 = scmp.eq.s32.totalorder %s19, 0
      %p93 = por %p91, %p92
      %p94 = scmp.ne.s32.totalorder %s80, %s81
      %p95 = scmp.eq.s32.totalorder %s20, 1
      %p96 = por %p94, %p95
      %p98 = scmp.ne.s32.totalorder %s81, %s97
      %p99 = scmp.eq.s32.totalorder %s20, 0
      %p100 = por %p98, %p99
      %s101 = ssub.s32 %s21, %s40
      %s102 = ssub.s32 %s22, %s36
      %s103 = sor.u32 %s101, %s102
      %p104 = scmp.eq.s32.totalorder %s103, 0
      %s106 = sadd.s32 %s105, 1
      %s107 = scalar_select %p104, %s105, %s106
      %p110 = pneg %p104
      %p111 = scmp.eq.s32.totalorder %s14, 1
      %p112 = por %p110, %p111
      %p113 = scmp.ne.s32.totalorder %s105, %s108
      %p114 = scmp.eq.s32.totalorder %s14, 0
      %p115 = por %p113, %p114
      %p116 = scmp.ne.s32.totalorder %s105, %s108
      %p117 = scmp.eq.s32.totalorder %s19, 1
      %p118 = por %p116, %p117
      %p119 = scmp.ne.s32.totalorder %s108, %s109
      %p120 = scmp.eq.s32.totalorder %s19, 0
      %p121 = por %p119, %p120
      %p122 = scmp.ne.s32.totalorder %s108, %s109
      %p123 = scmp.eq.s32.totalorder %s20, 1
      %p124 = por %p122, %p123
      %p126 = scmp.ne.s32.totalorder %s109, %s125
      %p127 = scmp.eq.s32.totalorder %s20, 0
      %p128 = por %p126, %p127
      %p129 = scmp.le.s32.totalorder 1, %s14
      %p130 = scmp.lt.s32.totalorder %s14, 3
      %p131 = pnand %p129, %p130
      %p132 = pneg %p131
      // Predicated region
      $region9: #{tpu_custom_call.1} parent=5 // pred_check
        _
      $region10: #{tpu_custom_call.1} parent=5 // pred_check_branch
        %134 = sbr.rel (%p131) target = $region12
      $region11: #{tpu_custom_call.1} parent=5 // pred_region
        %s135 = ssub.s32 %s14, 1
      $region12: #{tpu_custom_call.1} parent=5 // pred_fallthru
        _
      %p136 = scmp.lt.s32.totalorder %s14, 2
      // Predicated region
      $region13: #{tpu_custom_call.1} parent=5 // pred_check
        %p137 = pneg %p136
      $region14: #{tpu_custom_call.1} parent=5 // pred_check_branch
        %139 = sbr.rel (%p137) target = $region16
      $region15: #{tpu_custom_call.1} parent=5 // pred_region
        // Predicated region
        $region17: #{tpu_custom_call.1} parent=15 // pred_check
          %p140 = pneg %p57
        $region18: #{tpu_custom_call.1} parent=15 // pred_check_branch
          %142 = sbr.rel (%p140) target = $region20
        $region19: #{tpu_custom_call.1} parent=15 // pred_region
          %s143 = sand.u32 %s47, 1
          %s144 = scalar_lea.sflag [#allocation5], %s143
          %s145 = sand.u32 %s47, 1
          %s146 = smul.addr %s145, 8
          %s147 = scalar_lea.vmem [#allocation4], %s146
          %s148 = sadd.s32 %s22, %s23
          %s149 = smul.u32 2, %s148
          %s151 = ssub.s32 128, 128
          %152 = vsyncadd %s144, %s151
          %s153 = smul.addr %s21, 2
          %s154 = sadd.s32 %s149, %s153
          %s155 = smul.addr %s154, 64
          %s156 = scalar_lea.hbm %s0, %s155
          %s158 = sshll.u32 %s147, 4
          %s159 = int_to_ptr.vmem [resolvable:$true] %s158
          %161 = dma.hbm_to_vmem [thread:$0]  %s156, 128, %s159, %s144
        $region20: #{tpu_custom_call.1} parent=15 // pred_fallthru
          _
        // Predicated region
        $region21: #{tpu_custom_call.1} parent=15 // pred_check
          %p162 = pneg %p87
        $region22: #{tpu_custom_call.1} parent=15 // pred_check_branch
          %164 = sbr.rel (%p162) target = $region24
        $region23: #{tpu_custom_call.1} parent=15 // pred_region
          %s165 = sand.u32 %s77, 1
          %s166 = scalar_lea.sflag [#allocation7], %s165
          %s167 = sand.u32 %s77, 1
          %s168 = smul.addr %s167, 2
          %s169 = scalar_lea.vmem [#allocation6], %s168
          %s170 = sadd.s32 %s22, %s23
          %s171 = smul.u32 2, %s170
          %s173 = ssub.s32 32, 32
          %174 = vsyncadd %s166, %s173
          %s175 = smul.addr %s21, 2
          %s176 = sadd.s32 %s171, %s175
          %s177 = smul.addr %s176, 16
          %s178 = scalar_lea.hbm %s1, %s177
          %s180 = sshll.u32 %s169, 4
          %s181 = int_to_ptr.vmem [resolvable:$true] %s180
          %183 = dma.hbm_to_vmem [thread:$0]  %s178, 32, %s181, %s166
        $region24: #{tpu_custom_call.1} parent=15 // pred_fallthru
          _
      $region16: #{tpu_custom_call.1} parent=5 // pred_fallthru
        _
      %p184 = scmp.le.s32.totalorder 1, %s14
      %p185 = scmp.lt.s32.totalorder %s14, 3
      %p186 = pnand %p184, %p185
      %p187 = pneg %p186
      // Predicated region
      $region25: #{tpu_custom_call.1} parent=5 // pred_check
        _
      $region26: #{tpu_custom_call.1} parent=5 // pred_check_branch
        %189 = sbr.rel (%p186) target = $region28
      $region27: #{tpu_custom_call.1} parent=5 // pred_region
        %s190 = ssub.s32 %s14, 1
        %s191 = sand.u32 %s50, 1
        %s192 = scalar_lea.sflag [#allocation5], %s191
        %s193 = sand.u32 %s50, 1
        %s194 = smul.addr %s193, 8
        %s195 = scalar_lea.vmem [#allocation4], %s194
        // Predicated region
        $region29: #{tpu_custom_call.1} parent=27 // pred_check
          %p196 = pneg %p63
        $region30: #{tpu_custom_call.1} parent=27 // pred_check_branch
          %198 = sbr.rel (%p196) target = $region32
        $region31: #{tpu_custom_call.1} parent=27 // pred_region
          %199 = dma.done %s192, 128
        $region32: #{tpu_custom_call.1} parent=27 // pred_fallthru
          _
        %s200 = sand.u32 %s80, 1
        %s201 = scalar_lea.sflag [#allocation7], %s200
        %s202 = sand.u32 %s80, 1
        %s203 = smul.addr %s202, 2
        %s204 = scalar_lea.vmem [#allocation6], %s203
        // Predicated region
        $region33: #{tpu_custom_call.1} parent=27 // pred_check
          %p205 = pneg %p93
        $region34: #{tpu_custom_call.1} parent=27 // pred_check_branch
          %207 = sbr.rel (%p205) target = $region36
        $region35: #{tpu_custom_call.1} parent=27 // pred_region
          %208 = dma.done %s201, 32
        $region36: #{tpu_custom_call.1} parent=27 // pred_fallthru
          _
        %s209 = sand.u32 %s50, 1
        %s210 = scalar_lea.sflag [#allocation5], %s209
        %s211 = sand.u32 %s50, 1
        %s212 = smul.addr %s211, 8
        %s213 = scalar_lea.vmem [#allocation4], %s212
        %p214 = pneg %p63
        %p215 = pneg %p60
        %s216 = sand.u32 %s80, 1
        %s217 = scalar_lea.sflag [#allocation7], %s216
        %s218 = sand.u32 %s80, 1
        %s219 = smul.addr %s218, 2
        %s220 = scalar_lea.vmem [#allocation6], %s219
        %p221 = pneg %p93
        %p222 = pneg %p90
        %p223 = pneg %p121
        %p224 = pneg %p118
        %p225 = scmp.lt.s32.totalorder %s24, 1
        %s226 = scalar_select %p225, %s24, 1
        %p227 = scmp.lt.s32.totalorder %s25, 0
        %s228 = scalar_select %p227, %s25, 0
        %s229 = sadd.s32 %s228, %s226
        %s230 = smul.addr %s229, 4
        %s231 = scalar_lea.vmem %s2, %s230
        %s232 = sadd.s32 %s25, %s26
        %s233 = smul.u32 2, %s232
        %s234 = sadd.s32 %s25, %s26
        %s235 = smul.u32 2, %s234
        %p236 = scmp.lt.s32.totalorder %s24, 1
        %s237 = scalar_select %p236, %s24, 1
        %p238 = scmp.lt.s32.totalorder %s25, 0
        %s239 = scalar_select %p238, %s25, 0
        %s240 = sadd.s32 %s239, %s237
        %s241 = smul.addr %s240, 4
        %s242 = scalar_lea.vmem %s2, %s241
        %p243 = scmp.eq.s32.totalorder %s26, 0
        // Predicated region
        $region37: #{tpu_custom_call.1} parent=27 // pred_check
          %p244 = pneg %p243
        $region38: #{tpu_custom_call.1} parent=27 // pred_check_branch
          %246 = sbr.rel (%p244) target = $region40
        $region39: #{tpu_custom_call.1} parent=27 // pred_region
          %247 = vst [vmem:[#allocation2] sm:$0xff] 0
          %v248 = vlaneseq
          %v249 = vshrl.u32 %v248, 7
          %v251 = vunpack.c.l.s4 839922192
          %v252 = vunpack.c.0.s8 %v251
          %v253 = vlaneseq
          %v254 = vshrl.u32 %v253, 7
          %v255 = vsub.s32 %v252, %v254
          %v256 = vrot.slane %v249, %v255
          %257 = vst [vmem:[#allocation3] sm:$0xff] %v256
        $region40: #{tpu_custom_call.1} parent=27 // pred_fallthru
          _
        %v258 = vld [vmem:[%s195] sm:$0xff]
        %v259 = vld [vmem:[%s204] sm:$0x3]
        %v260 = vld [vmem:[#allocation3] sm:$0xff]
        %v262 = vcombine.high %v258, %v258
        %vm264 = vcmask 1043456
        %v265 = vsel %vm264, %v258, -inf
        %v266 = vrot.slane %v265, 4
        %v267 = vmax.f32 %v265, %v266
        %v268 = vrot.slane %v267, 2
        %v269 = vmax.f32 %v267, %v268
        %v270 = vrot.slane %v269, 1
        %v271 = vmax.f32 %v269, %v270
        %v272 = vsel %vm264, %v262, -inf
        %v273 = vrot.slane %v272, 4
        %v274 = vmax.f32 %v272, %v273
        %v275 = vrot.slane %v274, 2
        %v276 = vmax.f32 %v274, %v275
        %v277 = vrot.slane %v276, 1
        %v278 = vmax.f32 %v276, %v277
        %v281 = vcombine.low %v271, %v278
        %vm283 = vcmp.eq.f32.partialorder %v258, %v281
        %v284 = vsel %vm283, %v260, 4
        %v285 = vcombine.high %v284, %v284
        %v286 = vsel %vm264, %v284, 2147483647
        %v287 = vrot.slane %v286, 4
        %vm288 = vcmp.lt.s32.totalorder %v286, %v287
        %v289 = vsel %vm288, %v286, %v287
        %v290 = vrot.slane %v289, 2
        %vm291 = vcmp.lt.s32.totalorder %v289, %v290
        %v292 = vsel %vm291, %v289, %v290
        %v293 = vrot.slane %v292, 1
        %vm294 = vcmp.lt.s32.totalorder %v292, %v293
        %v295 = vsel %vm294, %v292, %v293
        %v296 = vsel %vm264, %v285, 2147483647
        %v297 = vrot.slane %v296, 4
        %vm298 = vcmp.lt.s32.totalorder %v296, %v297
        %v299 = vsel %vm298, %v296, %v297
        %v300 = vrot.slane %v299, 2
        %vm301 = vcmp.lt.s32.totalorder %v299, %v300
        %v302 = vsel %vm301, %v299, %v300
        %v303 = vrot.slane %v302, 1
        %vm304 = vcmp.lt.s32.totalorder %v302, %v303
        %v305 = vsel %vm304, %v302, %v303
        %v306 = vcombine.high %v260, %v260
        %vm307 = vcmp.eq.s32.totalorder %v295, %v260
        %vm308 = vcmp.eq.s32.totalorder %v305, %v306
        %v309 = vsel %vm307, 1, 0
        %v310 = vsel %vm308, 1, 0
        %v311 = vlaneseq
        %v312 = vshrl.u32 %v311, 7
        %v313 = vsub.s32 0, %v312
        %v314 = vrot.slane %v259, %v313
        %v315 = vlaneseq
        %v316 = vshrl.u32 %v315, 7
        %v317 = vsub.s32 1, %v316
        %v318 = vrot.slane %v259, %v317
        %vm319 = vcmp.eq.s32.totalorder %v314, %v260
        %vm320 = vcmp.eq.s32.totalorder %v318, %v306
        %v321 = vsel %vm319, 1, 0
        %v322 = vsel %vm320, 1, 0
        %v323 = vld [vmem:[#allocation2] sm:$0xff]
        %v324 = vadd.s32 %v309, %v321
        %v325 = vadd.s32 %v310, %v322
        %vm326 = vmand %vm307, %vm319
        %vm327 = vmand %vm308, %vm320
        %v328 = vsel %vm326, 1, 0
        %v329 = vsel %vm327, 1, 0
        %v330 = vshll.u32 %v328, 16
        %v331 = vshll.u32 %v329, 16
        %v332 = vadd.s32 %v324, %v330
        %v333 = vadd.s32 %v325, %v331
        %v334 = vcombine.low %v332, %v333
        %v335 = vadd.s32 %v323, %v334
        %336 = vst [vmem:[#allocation2] sm:$0xff] %v335
        // Predicated region
        $region41: #{tpu_custom_call.1} parent=27 // pred_check
          %p337 = pneg %p243
        $region42: #{tpu_custom_call.1} parent=27 // pred_check_branch
          %339 = sbr.rel (%p337) target = $region44
        $region43: #{tpu_custom_call.1} parent=27 // pred_region
          %v340 = vld [vmem:[#allocation2] sm:$0xff]
          %v341 = vshra.s32 %v340, 16
          %v342 = vcombine.high %v341, %v341
          %v343 = vsel %vm264, %v341, 0
          %v344 = vsel %vm264, %v342, 0
          %v345 = vadd.s32 %v343, %v344
          %v346 = vand.u32 %v345, 65535
          %v347 = vshrl.u32 %v345, 16
          %v348 = vcvt.s32.f32 %v346
          %v349 = vcvt.s32.f32 %v347
          %350 = vadd.xlane.f32.xlu0 %v348
          %v351 = vpop.xlane.xlu0 %350
          %352 = vadd.xlane.f32.xlu0 %v349
          %v353 = vpop.xlane.xlu0 %352
          %v354 = vcvt.f32.s32 %v351
          %v355 = vcvt.f32.s32 %v353
          %v356 = vshll.u32 %v355, 16
          %v357 = vadd.s32 %v356, %v354
          %v358 = vand.u32 %v340, 65535
          %v359 = vcombine.high %v358, %v358
          %v360 = vsel %vm264, %v358, 0
          %v361 = vsel %vm264, %v359, 0
          %v362 = vadd.s32 %v360, %v361
          %v363 = vand.u32 %v362, 65535
          %v364 = vshrl.u32 %v362, 16
          %v365 = vcvt.s32.f32 %v363
          %v366 = vcvt.s32.f32 %v364
          %367 = vadd.xlane.f32.xlu0 %v365
          %v368 = vpop.xlane.xlu0 %367
          %369 = vadd.xlane.f32.xlu0 %v366
          %v370 = vpop.xlane.xlu0 %369
          %v371 = vcvt.f32.s32 %v368
          %v372 = vcvt.f32.s32 %v370
          %v373 = vshll.u32 %v372, 16
          %v374 = vadd.s32 %v373, %v371
          %v375 = vsub.s32 %v374, %v357
          %vm376 = vcmask 7168
          %v377 = vsel %vm376, %v357, %v375
          %vm378 = vcmask 11264
          %379 = vst.msk [vmem:[%s242] sm:$0xf] %vm378, %v377
        $region44: #{tpu_custom_call.1} parent=27 // pred_fallthru
          _
        %p380 = scmp.lt.s32.totalorder %s24, 1
        %s381 = scalar_select %p380, %s24, 1
        %p382 = scmp.lt.s32.totalorder %s25, 0
        %s383 = scalar_select %p382, %s25, 0
        %s384 = sadd.s32 %s383, %s381
        %s385 = smul.addr %s384, 4
        %s386 = scalar_lea.vmem %s2, %s385
        // Predicated region
        $region45: #{tpu_custom_call.1} parent=27 // pred_check
          %p387 = pneg %p118
        $region46: #{tpu_custom_call.1} parent=27 // pred_check_branch
          %389 = sbr.rel (%p387) target = $region48
        $region47: #{tpu_custom_call.1} parent=27 // pred_region
          _
        $region48: #{tpu_custom_call.1} parent=27 // pred_fallthru
          _
      $region28: #{tpu_custom_call.1} parent=5 // pred_fallthru
        _
      %p390 = scmp.le.s32.totalorder 2, %s14
      // Predicated region
      $region49: #{tpu_custom_call.1} parent=5 // pred_check
        %p391 = pneg %p390
      $region50: #{tpu_custom_call.1} parent=5 // pred_check_branch
        %393 = sbr.rel (%p391) target = $region52
      $region51: #{tpu_custom_call.1} parent=5 // pred_region
        %s394 = ssub.s32 %s14, 2
        // Predicated region
        $region53: #{tpu_custom_call.1} parent=51 // pred_check
          %p395 = pneg %p124
        $region54: #{tpu_custom_call.1} parent=51 // pred_check_branch
          %397 = sbr.rel (%p395) target = $region56
        $region55: #{tpu_custom_call.1} parent=51 // pred_region
          %p398 = scmp.lt.s32.totalorder %s27, 1
          %s399 = scalar_select %p398, %s27, 1
          %p400 = scmp.lt.s32.totalorder %s28, 0
          %s401 = scalar_select %p400, %s28, 0
          %s402 = sadd.s32 %s401, %s399
          %s403 = smul.addr %s402, 4
          %s404 = scalar_lea.vmem %s2, %s403
        $region56: #{tpu_custom_call.1} parent=51 // pred_fallthru
          _
      $region52: #{tpu_custom_call.1} parent=5 // pred_fallthru
        _
    $region6: #{tpu_custom_call.1} parent=1 // loop_footer
      %s18 = sadd.s32 1, %s14
    $region7: #{tpu_custom_call.1} parent=1 // loop_footer_branch
      %13 = sbr.rel target = $region3
    $region8: #{tpu_custom_call.1} parent=1 // loop_exit
      _
    %405 = vsyncpa [#allocation5], 1
    %s406 = scalar_lea.sflag [#allocation5], 1
    %407 = vsyncpa %s406, 1
    %408 = vsyncpa [#allocation7], 1
    %s409 = scalar_lea.sflag [#allocation7], 1
    %410 = vsyncpa %s409, 1

</llo_original>
